<compile_context>
chip_gen: v7x
topology: tpu7x:2x2x1
jax: 0.10.0
libtpu: 0.0.40
codegen_flags: <defaults>
</compile_context>

<pallas_src>
import functools
import math

import jax
import jax.numpy as jnp
from jax.experimental import pallas as pl
from jax.experimental.pallas import tpu as pltpu

_F32 = jnp.float32
_BF16 = jnp.bfloat16


# ---------------------------------------------------------------------------
# Stage 1: K/V input projection + head split (runs once per batch / seq chunk).
# ---------------------------------------------------------------------------
def kv_project_kernel(k_ref, v_ref, wk_ref, wv_ref, bk_ref, bv_ref,
                      kh_ref, vh_ref, *, num_heads):
    k_bf = k_ref[0].astype(_BF16)                       # (TL, E)
    v_bf = v_ref[0].astype(_BF16)
    TL, E = k_bf.shape
    H = num_heads
    Dh = E // H
    kp = jnp.dot(k_bf, wk_ref[...], preferred_element_type=_F32) + bk_ref[...]
    vp = jnp.dot(v_bf, wv_ref[...], preferred_element_type=_F32) + bv_ref[...]
    # Head-split relayout happens exactly once here (not per q-tile).
    kh_ref[0] = jnp.transpose(kp.reshape(TL, H, Dh), (1, 0, 2)).astype(kh_ref.dtype)
    vh_ref[0] = jnp.transpose(vp.reshape(TL, H, Dh), (1, 0, 2)).astype(vh_ref.dtype)


# ---------------------------------------------------------------------------
# Stage 2: flash-style attention + output projection + residual + LayerNorm.
# ---------------------------------------------------------------------------
def fused_attention_kernel(q_ref, kh_ref, vh_ref,
                           wq_ref, bq_ref, wo_ref, bo_ref,
                           gamma_ref, beta_ref,
                           out_ref,
                           qh_sc, m_sc, l_sc, acc_sc,
                           *, num_heads):
    kv = pl.program_id(2)
    H = num_heads
    TQ, E = q_ref.shape[1], q_ref.shape[2]
    Dh = E // H

    @pl.when(kv == 0)
    def _init():
        # Q projection (1/sqrt(Dh) folded into wq/bq) once per q-tile.
        q_bf = q_ref[0].astype(_BF16)                                        # (TQ, E)
        qp = jnp.dot(q_bf, wq_ref[...], preferred_element_type=_F32) + bq_ref[...]
        qh_sc[...] = jnp.transpose(qp.reshape(TQ, H, Dh), (1, 0, 2)).astype(_BF16)
        m_sc[...] = jnp.full(m_sc.shape, -jnp.inf, dtype=m_sc.dtype)
        l_sc[...] = jnp.zeros(l_sc.shape, dtype=l_sc.dtype)
        acc_sc[...] = jnp.zeros(acc_sc.shape, dtype=acc_sc.dtype)

    kh = kh_ref[0]                                                           # (H, TK, Dh) bf16
    vh = vh_ref[0]
    # NOTE: score contraction width is Dh; if Dh < 128 this is the MXU
    # utilization floor.  TODO(synk): pack multiple heads per MXU pass when Dh < 128.
    s = jnp.einsum('hqd,hkd->hqk', qh_sc[...], kh,
                   preferred_element_type=_F32)                              # (H, TQ, TK)
    m_new = jnp.maximum(m_sc[...], s.max(-1, keepdims=True))
    alpha = jnp.exp(m_sc[...] - m_new)
    p = jnp.exp(s - m_new)                                                   # f32 probs
    l_sc[...] = alpha * l_sc[...] + p.sum(-1, keepdims=True)
    acc_sc[...] = alpha * acc_sc[...] + jnp.einsum(
        'hqk,hkd->hqd', p.astype(_BF16), vh, preferred_element_type=_F32)
    m_sc[...] = m_new

    @pl.when(kv == pl.num_programs(2) - 1)
    def _finalize():
        ctx = acc_sc[...] / l_sc[...]                                        # (H, TQ, Dh) f32
        # Head merge folded into the output projection: per-head matmul against
        # wo reshaped to (H, Dh, E) + cheap head-sum (no (TQ, H*Dh) relayout).
        per_head = jnp.einsum('hqd,hde->hqe', ctx.astype(_BF16), wo_ref[...],
                              preferred_element_type=_F32)                   # (H, TQ, E)
        attn_out = jnp.sum(per_head, axis=0) + bo_ref[...]                   # (TQ, E)
        # Dropout == identity (inference); residual + LayerNorm (eps = 1e-5).
        x = q_ref[0].astype(_F32) + attn_out
        mean = jnp.mean(x, axis=-1, keepdims=True)
        var = jnp.mean((x - mean) ** 2, axis=-1, keepdims=True)
        y = (x - mean) * jax.lax.rsqrt(var + 1e-5)
        out_ref[0] = (y * gamma_ref[...] + beta_ref[...]).astype(out_ref.dtype)


# ---------------------------------------------------------------------------
# Parameters.
# ---------------------------------------------------------------------------
def init_fusion_params(key, embed_dim):
    """Deterministic synthetic parameters matching nn.MultiheadAttention/LayerNorm shapes."""
    E = embed_dim
    k1, k2, k3, k4 = jax.random.split(key, 4)
    in_proj_w = jax.random.normal(k1, (3 * E, E), _F32) * 0.05               # (3E, E)
    in_proj_b = jax.random.normal(k3, (3 * E,), _F32) * 0.02
    out_w = jax.random.normal(k2, (E, E), _F32) * 0.05                       # out_proj Linear(E, E)
    out_b = jax.random.normal(k4, (E,), _F32) * 0.02
    return {
        # Transposed so the kernels compute x @ W_t (== x @ W.T in torch).
        "wq_t": in_proj_w[0:E, :].T,
        "wk_t": in_proj_w[E:2 * E, :].T,
        "wv_t": in_proj_w[2 * E:3 * E, :].T,
        "wo_t": out_w.T,
        "bq": in_proj_b[0:E].reshape(1, E),
        "bk": in_proj_b[E:2 * E].reshape(1, E),
        "bv": in_proj_b[2 * E:3 * E].reshape(1, E),
        "bo": out_b.reshape(1, E),
        "gamma": jnp.ones((1, E), _F32),   # LayerNorm weight
        "beta": jnp.zeros((1, E), _F32),   # LayerNorm bias
    }


def prepare_fusion_params(params, num_heads):
    """One-time param transform: fold 1/sqrt(Dh) into wq/bq, bf16 matmul weights,
    wo reshaped to per-head (H, Dh, E)."""
    E = params["wq_t"].shape[0]
    H = num_heads
    Dh = E // H
    scale = 1.0 / math.sqrt(Dh)
    return {
        "wq": (params["wq_t"] * scale).astype(_BF16),
        "wk": params["wk_t"].astype(_BF16),
        "wv": params["wv_t"].astype(_BF16),
        "wo_h": params["wo_t"].reshape(H, Dh, E).astype(_BF16),
        "bq": (params["bq"] * scale).astype(_F32),
        "bk": params["bk"].astype(_F32),
        "bv": params["bv"].astype(_F32),
        "bo": params["bo"].astype(_F32),
        "gamma": params["gamma"].astype(_F32),
        "beta": params["beta"].astype(_F32),
    }


# ---------------------------------------------------------------------------
# Tiling / VMEM budget helpers.
# ---------------------------------------------------------------------------
def _vmem_budget_bytes():
    cap = 128 * 1024 * 1024
    try:
        info = pltpu.get_tpu_info()
        for attr in ("vmem_capacity_bytes", "vmem_size_bytes", "vmem_bytes"):
            v = getattr(info, attr, None)
            if isinstance(v, (int, float)) and v > 0:
                cap = int(v)
                break
    except Exception:
        pass
    # Leave headroom for compiler scratch (~54 MiB on v7x, ~109 MiB on v5e/v6e).
    return int(cap * 0.85)


def _pick_tile(n, max_tile):
    """Largest tile <= max_tile that divides n exactly (no masked softmax tails),
    else the full axis."""
    if n <= max_tile:
        return n
    t = max_tile
    while t >= 8:
        if n % t == 0:
            return t
        t //= 2
    return n


def _estimate_attn_vmem(tq, tk, E, H, Dh, itemsize):
    est = 0
    est += 2 * tq * E * itemsize                 # q block (double-buffered)
    est += 2 * tq * E * itemsize                 # out block
    est += 2 * 2 * H * tk * Dh * 2               # kh + vh bf16 blocks (x2 bufs)
    est += 2 * E * E * 2 + 6 * E * 4             # wq + wo bf16, biases / LN vecs
    est += H * tq * Dh * 2                       # qh scratch (bf16)
    est += 2 * H * tq * 4                        # m, l scratch
    est += H * tq * Dh * 4                       # acc scratch
    est += H * tq * tk * (4 + 4 + 2)             # s (f32), p (f32), p (bf16)
    est += H * tq * E * 4 + 3 * tq * E * 4       # finalize intermediates
    return int(est * 5 // 4)                     # ~25% headroom


def _fit_tiles(L, B, E, H, Dh, itemsize, budget):
    tq = _pick_tile(L, 512)
    tk = _pick_tile(L, 1024)
    while _estimate_attn_vmem(tq, tk, E, H, Dh, itemsize) > budget:
        if tk >= tq and tk > 128:
            new_tk = _pick_tile(L, max(tk // 2, 128))
            if new_tk < tk:
                tk = new_tk
                continue
        if tq > 128:
            new_tq = _pick_tile(L, max(tq // 2, 128))
            if new_tq < tq:
                tq = new_tq
                continue
        break
    # v7x has 2 TensorCores: guarantee >= 2 parallel grid steps when B == 1.
    if B == 1 and tq == L and L % 2 == 0 and (L // 2) >= 8:
        tq = L // 2
    return tq, tk


# ---------------------------------------------------------------------------
# Wrappers.
# ---------------------------------------------------------------------------
def fusion_layer_bld(q, k, v, params, num_heads):
    """Batch-major entry point: q/k/v are (B, L, E) float32; returns (B, L, E)."""
    B, L, E = q.shape
    assert E % num_heads == 0, "embed_dim must be divisible by num_heads"
    H = num_heads
    Dh = E // H
    prm = prepare_fusion_params(params, num_heads)
    budget = _vmem_budget_bytes()
    itemsize = jnp.dtype(q.dtype).itemsize

    # ----- Stage 1: K/V projection + head split, once per (batch, chunk). -----
    TL = _pick_tile(L, 512)
    nl = pl.cdiv(L, TL)
    kh, vh = pl.pallas_call(
        functools.partial(kv_project_kernel, num_heads=H),
        out_shape=(jax.ShapeDtypeStruct((B, H, L, Dh), _BF16),
                   jax.ShapeDtypeStruct((B, H, L, Dh), _BF16)),
        grid=(B, nl),
        in_specs=[pl.BlockSpec((1, TL, E), lambda b, li: (b, li, 0)),
                  pl.BlockSpec((1, TL, E), lambda b, li: (b, li, 0)),
                  pl.BlockSpec((E, E), lambda b, li: (0, 0)),
                  pl.BlockSpec((E, E), lambda b, li: (0, 0)),
                  pl.BlockSpec((1, E), lambda b, li: (0, 0)),
                  pl.BlockSpec((1, E), lambda b, li: (0, 0))],
        out_specs=(pl.BlockSpec((1, H, TL, Dh), lambda b, li: (b, 0, li, 0)),
                   pl.BlockSpec((1, H, TL, Dh), lambda b, li: (b, 0, li, 0))),
        compiler_params=pltpu.CompilerParams(
            dimension_semantics=("parallel", "parallel"),
            vmem_limit_bytes=int(budget)),
    )(k, v, prm["wk"], prm["wv"], prm["bk"], prm["bv"])

    # ----- Stage 2: flash attention + out proj + residual + LayerNorm. -----
    TQ, TK = _fit_tiles(L, B, E, H, Dh, itemsize, budget)
    nq = pl.cdiv(L, TQ)
    nkv = pl.cdiv(L, TK)
    est = _estimate_attn_vmem(TQ, TK, E, H, Dh, itemsize)
    vmem_limit = int(min(budget, max(est, 32 * 1024 * 1024)))

    kern = functools.partial(fused_attention_kernel, num_heads=H)
    out_shape = jax.ShapeDtypeStruct((B, L, E), q.dtype)
    scratch = [pltpu.VMEM((H, TQ, Dh), _BF16),   # projected Q (per q-tile)
               pltpu.VMEM((H, TQ, 1), _F32),     # running max
               pltpu.VMEM((H, TQ, 1), _F32),     # running sum
               pltpu.VMEM((H, TQ, Dh), _F32)]    # accumulator

    def _const_spec(shape, single_buffer):
        idx = lambda b, qi, kv: (0,) * len(shape)
        if single_buffer:
            return pl.BlockSpec(shape, idx, pipeline_mode=pl.Buffered(1))
        return pl.BlockSpec(shape, idx)

    def _run(single_buffer):
        in_specs = [
            pl.BlockSpec((1, TQ, E), lambda b, qi, kv: (b, qi, 0)),        # q
            pl.BlockSpec((1, H, TK, Dh), lambda b, qi, kv: (b, 0, kv, 0)),  # kh
            pl.BlockSpec((1, H, TK, Dh), lambda b, qi, kv: (b, 0, kv, 0)),  # vh
            _const_spec((E, E), single_buffer),                             # wq
            _const_spec((1, E), single_buffer),                             # bq
            _const_spec((H, Dh, E), single_buffer),                         # wo_h
            _const_spec((1, E), single_buffer),                             # bo
            _const_spec((1, E), single_buffer),                             # gamma
            _const_spec((1, E), single_buffer),                             # beta
        ]
        return pl.pallas_call(
            kern,
            out_shape=out_shape,
            grid=(B, nq, nkv),
            in_specs=in_specs,
            out_specs=pl.BlockSpec((1, TQ, E), lambda b, qi, kv: (b, qi, 0)),
            scratch_shapes=scratch,
            compiler_params=pltpu.CompilerParams(
                dimension_semantics=("parallel", "parallel", "arbitrary"),
                vmem_limit_bytes=vmem_limit),
        )(q, kh, vh, prm["wq"], prm["bq"], prm["wo_h"], prm["bo"],
          prm["gamma"], prm["beta"])

    try:
        return _run(True)      # single-buffer the constant operands
    except Exception:
        return _run(False)     # fallback if Buffered(1) is not supported here


def fusion_layer(query, key, value, params, num_heads):
    """PyTorch nn.MultiheadAttention convention: (L, B, E) in -> (L, B, E) out."""
    # TODO(synk): attn_mask / key_padding_mask are not supported (module never uses them).
    q = jnp.transpose(query, (1, 0, 2))
    k = jnp.transpose(key, (1, 0, 2))
    v = jnp.transpose(value, (1, 0, 2))
    out = fusion_layer_bld(q, k, v, params, num_heads)
    return jnp.transpose(out, (1, 0, 2))


if __name__ == "__main__":
    # Small, lane-dense demo config (E multiple of 128 keeps stores unmasked).
    L, B, E, H = 8, 2, 128, 4        # seq, batch, embed_dim, num_heads
    root = jax.random.PRNGKey(0)
    kq, kk, kv_, kp = jax.random.split(root, 4)

    query = jax.random.normal(kq, (L, B, E), jnp.float32)
    key_ = jax.random.normal(kk, (L, B, E), jnp.float32)
    value = jax.random.normal(kv_, (L, B, E), jnp.float32)

    params = init_fusion_params(kp, E)

    out = fusion_layer(query, key_, value, params, num_heads=H)
    out = jax.block_until_ready(out)
    assert out.shape == (L, B, E)
    assert bool(jnp.all(jnp.isfinite(out)))
    print("KERNEL_OK")
</pallas_src>

<mosaic_0001>
module attributes {stable_mosaic.version = 11 : i64} {
  func.func @kv_project_kernel(%arg0: i32, %arg1: i32, %arg2: memref<1x8x128xf32, #tpu.memory_space<vmem>>, %arg3: memref<1x8x128xf32, #tpu.memory_space<vmem>>, %arg4: memref<128x128xbf16, #tpu.memory_space<vmem>>, %arg5: memref<128x128xbf16, #tpu.memory_space<vmem>>, %arg6: memref<1x128xf32, #tpu.memory_space<vmem>>, %arg7: memref<1x128xf32, #tpu.memory_space<vmem>>, %arg8: memref<1x4x8x32xbf16, #tpu.memory_space<vmem>>, %arg9: memref<1x4x8x32xbf16, #tpu.memory_space<vmem>>) attributes {dimension_semantics = [#tpu.dimension_semantics<parallel>, #tpu.dimension_semantics<parallel>], iteration_bounds = array<i64: 2, 1>, scalar_prefetch = 0 : i64, scratch_operands = 0 : i64, tpu.core_type = #tpu.core_type<tc>, window_params = [{transform_indices = @transform_0, window_bounds = array<i64: 1, 8, 128>}, {transform_indices = @transform_1, window_bounds = array<i64: 1, 8, 128>}, {pipeline_mode = #tpu.pipeline_mode<synchronous>, transform_indices = @transform_2, window_bounds = array<i64: 128, 128>}, {pipeline_mode = #tpu.pipeline_mode<synchronous>, transform_indices = @transform_3, window_bounds = array<i64: 128, 128>}, {pipeline_mode = #tpu.pipeline_mode<synchronous>, transform_indices = @transform_4, window_bounds = array<i64: 1, 128>}, {pipeline_mode = #tpu.pipeline_mode<synchronous>, transform_indices = @transform_5, window_bounds = array<i64: 1, 128>}, {transform_indices = @transform_6, window_bounds = array<i64: 1, 4, 8, 32>}, {transform_indices = @transform_7, window_bounds = array<i64: 1, 4, 8, 32>}]} {
    %c0 = arith.constant 0 : index
    %c0_0 = arith.constant 0 : index
    %c0_1 = arith.constant 0 : index
    %0 = vector.load %arg2[%c0, %c0_0, %c0_1] : memref<1x8x128xf32, #tpu.memory_space<vmem>>, vector<1x8x128xf32>
    %1 = vector.shape_cast %0 : vector<1x8x128xf32> to vector<8x128xf32>
    %2 = arith.truncf %1 : vector<8x128xf32> to vector<8x128xbf16>
    %c0_2 = arith.constant 0 : index
    %c0_3 = arith.constant 0 : index
    %c0_4 = arith.constant 0 : index
    %3 = vector.load %arg3[%c0_2, %c0_3, %c0_4] : memref<1x8x128xf32, #tpu.memory_space<vmem>>, vector<1x8x128xf32>
    %4 = vector.shape_cast %3 : vector<1x8x128xf32> to vector<8x128xf32>
    %5 = arith.truncf %4 : vector<8x128xf32> to vector<8x128xbf16>
    %c0_5 = arith.constant 0 : index
    %c0_6 = arith.constant 0 : index
    %6 = vector.load %arg4[%c0_5, %c0_6] : memref<128x128xbf16, #tpu.memory_space<vmem>>, vector<128x128xbf16>
    %cst = arith.constant dense<0.000000e+00> : vector<8x128xf32>
    %7 = tpu.matmul %2, %6, %cst {dimension_numbers = #tpu.dot_dimension_numbers<[1], [0], [0], [1], [0, 0, 1, 1], [], []>} : vector<8x128xbf16>, vector<128x128xbf16>, vector<8x128xf32> -> vector<8x128xf32>
    %c0_7 = arith.constant 0 : index
    %c0_8 = arith.constant 0 : index
    %8 = vector.load %arg6[%c0_7, %c0_8] : memref<1x128xf32, #tpu.memory_space<vmem>>, vector<1x128xf32>
    %9 = vector.broadcast %8 : vector<1x128xf32> to vector<8x128xf32>
    %10 = arith.addf %7, %9 : vector<8x128xf32>
    %c0_9 = arith.constant 0 : index
    %c0_10 = arith.constant 0 : index
    %11 = vector.load %arg5[%c0_9, %c0_10] : memref<128x128xbf16, #tpu.memory_space<vmem>>, vector<128x128xbf16>
    %cst_11 = arith.constant dense<0.000000e+00> : vector<8x128xf32>
    %12 = tpu.matmul %5, %11, %cst_11 {dimension_numbers = #tpu.dot_dimension_numbers<[1], [0], [0], [1], [0, 0, 1, 1], [], []>} : vector<8x128xbf16>, vector<128x128xbf16>, vector<8x128xf32> -> vector<8x128xf32>
    %c0_12 = arith.constant 0 : index
    %c0_13 = arith.constant 0 : index
    %13 = vector.load %arg7[%c0_12, %c0_13] : memref<1x128xf32, #tpu.memory_space<vmem>>, vector<1x128xf32>
    %14 = vector.broadcast %13 : vector<1x128xf32> to vector<8x128xf32>
    %15 = arith.addf %12, %14 : vector<8x128xf32>
    %16 = vector.shape_cast %10 : vector<8x128xf32> to vector<8x4x32xf32>
    %17 = tpu.transpose %16, [1, 0, 2] : vector<8x4x32xf32> -> vector<4x8x32xf32>
    %18 = arith.truncf %17 : vector<4x8x32xf32> to vector<4x8x32xbf16>
    %c0_14 = arith.constant 0 : index
    %c0_15 = arith.constant 0 : index
    %c0_16 = arith.constant 0 : index
    %c0_17 = arith.constant 0 : index
    %19 = vector.load %arg8[%c0_14, %c0_15, %c0_16, %c0_17] : memref<1x4x8x32xbf16, #tpu.memory_space<vmem>>, vector<1x4x8x32xbf16>
    %20 = vector.shape_cast %19 : vector<1x4x8x32xbf16> to vector<4x8x32xbf16>
    %21 = vector.shape_cast %18 : vector<4x8x32xbf16> to vector<1x4x8x32xbf16>
    tpu.vector_store %arg8[%c0_14, %c0_15, %c0_16, %c0_17], %21 {strides = array<i32>} : memref<1x4x8x32xbf16, #tpu.memory_space<vmem>>, vector<1x4x8x32xbf16>,
    %22 = vector.shape_cast %15 : vector<8x128xf32> to vector<8x4x32xf32>
    %23 = tpu.transpose %22, [1, 0, 2] : vector<8x4x32xf32> -> vector<4x8x32xf32>
    %24 = arith.truncf %23 : vector<4x8x32xf32> to vector<4x8x32xbf16>
    %c0_18 = arith.constant 0 : index
    %c0_19 = arith.constant 0 : index
    %c0_20 = arith.constant 0 : index
    %c0_21 = arith.constant 0 : index
    %25 = vector.load %arg9[%c0_18, %c0_19, %c0_20, %c0_21] : memref<1x4x8x32xbf16, #tpu.memory_space<vmem>>, vector<1x4x8x32xbf16>
    %26 = vector.shape_cast %25 : vector<1x4x8x32xbf16> to vector<4x8x32xbf16>
    %27 = vector.shape_cast %24 : vector<4x8x32xbf16> to vector<1x4x8x32xbf16>
    tpu.vector_store %arg9[%c0_18, %c0_19, %c0_20, %c0_21], %27 {strides = array<i32>} : memref<1x4x8x32xbf16, #tpu.memory_space<vmem>>, vector<1x4x8x32xbf16>,
    return
  }
  func.func @transform_0(%arg0: i32, %arg1: i32) -> (i32, i32, i32) {
    %c0_i32 = arith.constant 0 : i32
    %c0_i32_0 = arith.constant 0 : i32
    return %arg0, %arg1, %c0_i32 : i32, i32, i32
  }
  func.func @transform_1(%arg0: i32, %arg1: i32) -> (i32, i32, i32) {
    %c0_i32 = arith.constant 0 : i32
    %c0_i32_0 = arith.constant 0 : i32
    return %arg0, %arg1, %c0_i32 : i32, i32, i32
  }
  func.func @transform_2(%arg0: i32, %arg1: i32) -> (i32, i32) {
    %c0_i32 = arith.constant 0 : i32
    %c0_i32_0 = arith.constant 0 : i32
    %c0_i32_1 = arith.constant 0 : i32
    return %c0_i32, %c0_i32_0 : i32, i32
  }
  func.func @transform_3(%arg0: i32, %arg1: i32) -> (i32, i32) {
    %c0_i32 = arith.constant 0 : i32
    %c0_i32_0 = arith.constant 0 : i32
    %c0_i32_1 = arith.constant 0 : i32
    return %c0_i32, %c0_i32_0 : i32, i32
  }
  func.func @transform_4(%arg0: i32, %arg1: i32) -> (i32, i32) {
    %c0_i32 = arith.constant 0 : i32
    %c0_i32_0 = arith.constant 0 : i32
    %c0_i32_1 = arith.constant 0 : i32
    return %c0_i32, %c0_i32_0 : i32, i32
  }
  func.func @transform_5(%arg0: i32, %arg1: i32) -> (i32, i32) {
    %c0_i32 = arith.constant 0 : i32
    %c0_i32_0 = arith.constant 0 : i32
    %c0_i32_1 = arith.constant 0 : i32
    return %c0_i32, %c0_i32_0 : i32, i32
  }
  func.func @transform_6(%arg0: i32, %arg1: i32) -> (i32, i32, i32, i32) {
    %c0_i32 = arith.constant 0 : i32
    %c0_i32_0 = arith.constant 0 : i32
    %c0_i32_1 = arith.constant 0 : i32
    return %arg0, %c0_i32, %arg1, %c0_i32_0 : i32, i32, i32, i32
  }
  func.func @transform_7(%arg0: i32, %arg1: i32) -> (i32, i32, i32, i32) {
    %c0_i32 = arith.constant 0 : i32
    %c0_i32_0 = arith.constant 0 : i32
    %c0_i32_1 = arith.constant 0 : i32
    return %arg0, %c0_i32, %arg1, %c0_i32_0 : i32, i32, i32, i32
  }
}

</mosaic_0001>

<llo_original>
// kernel: tpu_custom_call.1
$region0: #{tpu_custom_call.1}
  #allocation0 [shape = 'u32[]', space=smem, size = 0x4, offset = 0x4, fixed_abs, tag = 'smem constant byte address 0x4 - core index']
  #allocation1 [shape = 'u32[144,128]{1,0:T(1,128)}', space=vmem, size = 0x12000, scoped, tag = 'internal scratch']
  %s0 = inlined_call_operand.hbm [shape: f32[2,8,128], index: 0, kind: input, shape index: {}]
  %s1 = inlined_call_operand.hbm [shape: f32[2,8,128], index: 1, kind: input, shape index: {}]
  %s2 = inlined_call_operand.hbm [shape: bf16[128,128], index: 2, kind: input, shape index: {}]
  %s3 = inlined_call_operand.hbm [shape: bf16[128,128], index: 3, kind: input, shape index: {}]
  %s4 = inlined_call_operand.hbm [shape: f32[1,128], index: 4, kind: input, shape index: {}]
  %s5 = inlined_call_operand.hbm [shape: f32[1,128], index: 5, kind: input, shape index: {}]
  %s6 = inlined_call_operand.hbm [shape: bf16[2,4,8,32], index: 6, kind: output, shape index: {0}]
  %s7 = inlined_call_operand.hbm [shape: bf16[2,4,8,32], index: 7, kind: output, shape index: {1}]
  %8 = xla_tuple %s6, %s7
  %s9 = sld [smem:[#allocation0]]
  $region89: #{tpu_custom_call.1} parent=0
    _
  %s11 = ssub.s32 1, %s9
  %s12 = scalar_select 0, %s11, %s9
  $region1: #{tpu_custom_call.1} parent=0
    #allocation2 [shape = 'u8[8192]{0}', space=vmem, size = 0x2000, scoped, tag = 'input window, operand 0']
    #allocation3 [shape = 's32[2]{0}', space=sflag, size = 0x8, scoped, tag = 'scoped memory for tpu_custom_call.1']
    #allocation4 [shape = 's32[2]{0}', space=sflag, size = 0x8, scoped, tag = 'scoped memory for tpu_custom_call.1']
    #allocation5 [shape = 'u8[8192]{0}', space=vmem, size = 0x2000, scoped, tag = 'input window, operand 1']
    #allocation6 [shape = 's32[2]{0}', space=sflag, size = 0x8, scoped, tag = 'scoped memory for tpu_custom_call.1']
    #allocation7 [shape = 'u8[32768]{0}', space=vmem, size = 0x8000, scoped, tag = 'input window, operand 2, single buffered']
    #allocation8 [shape = 'u8[32768]{0}', space=vmem, size = 0x8000, scoped, tag = 'input window, operand 3, single buffered']
    #allocation9 [shape = 's32[1]{0}', space=sflag, size = 0x4, scoped, tag = 'scoped memory for tpu_custom_call.1']
    #allocation10 [shape = 'u8[512]{0}', space=vmem, size = 0x400, scoped, tag = 'input window, operand 4, single buffered']
    #allocation11 [shape = 'u8[512]{0}', space=vmem, size = 0x400, scoped, tag = 'input window, operand 5, single buffered']
    #allocation12 [shape = 's32[1]{0}', space=sflag, size = 0x4, scoped, tag = 'scoped memory for tpu_custom_call.1']
    #allocation13 [shape = 'u8[16384]{0}', space=vmem, size = 0x4000, scoped, tag = 'output window, operand 0']
    #allocation14 [shape = 'u8[16384]{0}', space=vmem, size = 0x4000, scoped, tag = 'output window, operand 1']
    #allocation15 [shape = 's32[2]{0}', space=sflag, size = 0x8, scoped, tag = 'scoped memory for tpu_custom_call.1']
    %13 = vsyncpa [#allocation3], 0
    %s14 = scalar_lea.sflag [#allocation3], 1
    %15 = vsyncpa %s14, 0
    %16 = vsyncpa [#allocation6], 0
    %s17 = scalar_lea.sflag [#allocation6], 1
    %18 = vsyncpa %s17, 0
    %19 = vsyncpa [#allocation9], 0
    %20 = vsyncpa [#allocation12], 0
    %21 = vsyncpa [#allocation4], 0
    %s22 = scalar_lea.sflag [#allocation4], 1
    %23 = vsyncpa %s22, 0
    %24 = vsyncpa [#allocation15], 0
    %s25 = scalar_lea.sflag [#allocation15], 1
    %26 = vsyncpa %s25, 0
    loop: start=0, step=1, limit=4
    $region2: #{tpu_custom_call.1} parent=1 // loop_pre_header
      _
    $region3: #{tpu_custom_call.1} parent=1 // loop_header
      %s28 = sphi 0, %s32
      %p29 = scmp.ge.s32.totalorder %s28, 4
      %s35 = sphi 0, %s47
      %s36 = sphi 0, %s43
      %s37 = sphi 0, %s35
      %s38 = sphi 0, %s36
      %s39 = sphi 0, %s37
      %s40 = sphi 0, %s38
      %s52 = sphi 0, %s54
      %s55 = sphi 0, %s52
      %s56 = sphi 0, %s55
      %s72 = sphi 0, %s56
      %s80 = sphi 0, %s82
      %s83 = sphi 0, %s80
      %s84 = sphi 0, %s83
      %s100 = sphi 0, %s84
      %s104 = sphi 0, %s104
      %s106 = sphi 0, %s104
      %s107 = sphi 0, %s106
      %s121 = sphi 0, %s107
      %s125 = sphi 0, %s125
      %s127 = sphi 0, %s125
      %s128 = sphi 0, %s127
      %s142 = sphi 0, %s128
      %s146 = sphi 0, %s146
      %s148 = sphi 0, %s146
      %s149 = sphi 0, %s148
      %s163 = sphi 0, %s149
      %s167 = sphi 0, %s167
      %s169 = sphi 0, %s167
      %s170 = sphi 0, %s169
      %s184 = sphi 0, %s170
      %s192 = sphi 0, %s194
      %s195 = sphi 0, %s192
      %s196 = sphi 0, %s195
      %s212 = sphi 0, %s196
      %s220 = sphi 0, %s222
      %s223 = sphi 0, %s220
      %s224 = sphi 0, %s223
      %s240 = sphi 0, %s224
    $region4: #{tpu_custom_call.1} parent=1 // loop_header_branch
      %31 = sbr.rel (%p29) target = $region8
    $region5: #{tpu_custom_call.1} parent=1 // loop_body
      %s33 = ssub.s32 %s28, 1
      %s34 = ssub.s32 %s28, 2
      %s41 = sadd.s32 1, %s36
      %p42 = scmp.ge.s32.totalorder %s41, 1
      %s43 = scalar_select %p42, 0, %s41
      %s44 = sadd.s32 1, %s35
      %s45 = scalar_select %p42, %s44, %s35
      %p46 = scmp.ge.s32.totalorder %s45, 2
      %s47 = scalar_select %p46, 0, %s45
      %s48 = ssub.s32 %s35, %s47
      %s49 = ssub.s32 %s36, %s43
      %s50 = sor.u32 %s48, %s49
      %p51 = scmp.eq.s32.totalorder %s50, 0
      %s53 = sadd.s32 %s52, 1
      %s54 = scalar_select %p51, %s52, %s53
      %p57 = pneg %p51
      %p58 = scmp.eq.s32.totalorder %s28, 1
      %p59 = por %p57, %p58
      %p60 = scmp.ne.s32.totalorder %s52, %s55
      %p61 = scmp.eq.s32.totalorder %s28, 0
      %p62 = por %p60, %p61
      %p63 = scmp.ne.s32.totalorder %s52, %s55
      %p64 = scmp.eq.s32.totalorder %s33, 1
      %p65 = por %p63, %p64
      %p66 = scmp.ne.s32.totalorder %s55, %s56
      %p67 = scmp.eq.s32.totalorder %s33, 0
      %p68 = por %p66, %p67
      %p69 = scmp.ne.s32.totalorder %s55, %s56
      %p70 = scmp.eq.s32.totalorder %s34, 1
      %p71 = por %p69, %p70
      %p73 = scmp.ne.s32.totalorder %s56, %s72
      %p74 = scmp.eq.s32.totalorder %s34, 0
      %p75 = por %p73, %p74
      %s76 = ssub.s32 %s35, %s47
      %s77 = ssub.s32 %s36, %s43
      %s78 = sor.u32 %s76, %s77
      %p79 = scmp.eq.s32.totalorder %s78, 0
      %s81 = sadd.s32 %s80, 1
      %s82 = scalar_select %p79, %s80, %s81
      %p85 = pneg %p79
      %p86 = scmp.eq.s32.totalorder %s28, 1
      %p87 = por %p85, %p86
      %p88 = scmp.ne.s32.totalorder %s80, %s83
      %p89 = scmp.eq.s32.totalorder %s28, 0
      %p90 = por %p88, %p89
      %p91 = scmp.ne.s32.totalorder %s80, %s83
      %p92 = scmp.eq.s32.totalorder %s33, 1
      %p93 = por %p91, %p92
      %p94 = scmp.ne.s32.totalorder %s83, %s84
      %p95 = scmp.eq.s32.totalorder %s33, 0
      %p96 = por %p94, %p95
      %p97 = scmp.ne.s32.totalorder %s83, %s84
      %p98 = scmp.eq.s32.totalorder %s34, 1
      %p99 = por %p97, %p98
      %p101 = scmp.ne.s32.totalorder %s84, %s100
      %p102 = scmp.eq.s32.totalorder %s34, 0
      %p103 = por %p101, %p102
      %s105 = sadd.s32 %s104, 1
      %p108 = scmp.eq.s32.totalorder %s28, 1
      %p109 = scmp.ne.s32.totalorder %s104, %s106
      %p110 = scmp.eq.s32.totalorder %s28, 0
      %p111 = por %p109, %p110
      %p112 = scmp.ne.s32.totalorder %s104, %s106
      %p113 = scmp.eq.s32.totalorder %s33, 1
      %p114 = por %p112, %p113
      %p115 = scmp.ne.s32.totalorder %s106, %s107
      %p116 = scmp.eq.s32.totalorder %s33, 0
      %p117 = por %p115, %p116
      %p118 = scmp.ne.s32.totalorder %s106, %s107
      %p119 = scmp.eq.s32.totalorder %s34, 1
      %p120 = por %p118, %p119
      %p122 = scmp.ne.s32.totalorder %s107, %s121
      %p123 = scmp.eq.s32.totalorder %s34, 0
      %p124 = por %p122, %p123
      %s126 = sadd.s32 %s125, 1
      %p129 = scmp.eq.s32.totalorder %s28, 1
      %p130 = scmp.ne.s32.totalorder %s125, %s127
      %p131 = scmp.eq.s32.totalorder %s28, 0
      %p132 = por %p130, %p131
      %p133 = scmp.ne.s32.totalorder %s125, %s127
      %p134 = scmp.eq.s32.totalorder %s33, 1
      %p135 = por %p133, %p134
      %p136 = scmp.ne.s32.totalorder %s127, %s128
      %p137 = scmp.eq.s32.totalorder %s33, 0
      %p138 = por %p136, %p137
      %p139 = scmp.ne.s32.totalorder %s127, %s128
      %p140 = scmp.eq.s32.totalorder %s34, 1
      %p141 = por %p139, %p140
      %p143 = scmp.ne.s32.totalorder %s128, %s142
      %p144 = scmp.eq.s32.totalorder %s34, 0
      %p145 = por %p143, %p144
      %s147 = sadd.s32 %s146, 1
      %p150 = scmp.eq.s32.totalorder %s28, 1
      %p151 = scmp.ne.s32.totalorder %s146, %s148
      %p152 = scmp.eq.s32.totalorder %s28, 0
      %p153 = por %p151, %p152
      %p154 = scmp.ne.s32.totalorder %s146, %s148
      %p155 = scmp.eq.s32.totalorder %s33, 1
      %p156 = por %p154, %p155
      %p157 = scmp.ne.s32.totalorder %s148, %s149
      %p158 = scmp.eq.s32.totalorder %s33, 0
      %p159 = por %p157, %p158
      %p160 = scmp.ne.s32.totalorder %s148, %s149
      %p161 = scmp.eq.s32.totalorder %s34, 1
      %p162 = por %p160, %p161
      %p164 = scmp.ne.s32.totalorder %s149, %s163
      %p165 = scmp.eq.s32.totalorder %s34, 0
      %p166 = por %p164, %p165
      %s168 = sadd.s32 %s167, 1
      %p171 = scmp.eq.s32.totalorder %s28, 1
      %p172 = scmp.ne.s32.totalorder %s167, %s169
      %p173 = scmp.eq.s32.totalorder %s28, 0
      %p174 = por %p172, %p173
      %p175 = scmp.ne.s32.totalorder %s167, %s169
      %p176 = scmp.eq.s32.totalorder %s33, 1
      %p177 = por %p175, %p176
      %p178 = scmp.ne.s32.totalorder %s169, %s170
      %p179 = scmp.eq.s32.totalorder %s33, 0
      %p180 = por %p178, %p179
      %p181 = scmp.ne.s32.totalorder %s169, %s170
      %p182 = scmp.eq.s32.totalorder %s34, 1
      %p183 = por %p181, %p182
      %p185 = scmp.ne.s32.totalorder %s170, %s184
      %p186 = scmp.eq.s32.totalorder %s34, 0
      %p187 = por %p185, %p186
      %s188 = ssub.s32 %s35, %s47
      %s189 = ssub.s32 %s36, %s43
      %s190 = sor.u32 %s188, %s189
      %p191 = scmp.eq.s32.totalorder %s190, 0
      %s193 = sadd.s32 %s192, 1
      %s194 = scalar_select %p191, %s192, %s193
      %p197 = pneg %p191
      %p198 = scmp.eq.s32.totalorder %s28, 1
      %p199 = por %p197, %p198
      %p200 = scmp.ne.s32.totalorder %s192, %s195
      %p201 = scmp.eq.s32.totalorder %s28, 0
      %p202 = por %p200, %p201
      %p203 = scmp.ne.s32.totalorder %s192, %s195
      %p204 = scmp.eq.s32.totalorder %s33, 1
      %p205 = por %p203, %p204
      %p206 = scmp.ne.s32.totalorder %s195, %s196
      %p207 = scmp.eq.s32.totalorder %s33, 0
      %p208 = por %p206, %p207
      %p209 = scmp.ne.s32.totalorder %s195, %s196
      %p210 = scmp.eq.s32.totalorder %s34, 1
      %p211 = por %p209, %p210
      %p213 = scmp.ne.s32.totalorder %s196, %s212
      %p214 = scmp.eq.s32.totalorder %s34, 0
      %p215 = por %p213, %p214
      %s216 = ssub.s32 %s35, %s47
      %s217 = ssub.s32 %s36, %s43
      %s218 = sor.u32 %s216, %s217
      %p219 = scmp.eq.s32.totalorder %s218, 0
      %s221 = sadd.s32 %s220, 1
      %s222 = scalar_select %p219, %s220, %s221
      %p225 = pneg %p219
      %p226 = scmp.eq.s32.totalorder %s28, 1
      %p227 = por %p225, %p226
      %p228 = scmp.ne.s32.totalorder %s220, %s223
      %p229 = scmp.eq.s32.totalorder %s28, 0
      %p230 = por %p228, %p229
      %p231 = scmp.ne.s32.totalorder %s220, %s223
      %p232 = scmp.eq.s32.totalorder %s33, 1
      %p233 = por %p231, %p232
      %p234 = scmp.ne.s32.totalorder %s223, %s224
      %p235 = scmp.eq.s32.totalorder %s33, 0
      %p236 = por %p234, %p235
      %p237 = scmp.ne.s32.totalorder %s223, %s224
      %p238 = scmp.eq.s32.totalorder %s34, 1
      %p239 = por %p237, %p238
      %p241 = scmp.ne.s32.totalorder %s224, %s240
      %p242 = scmp.eq.s32.totalorder %s34, 0
      %p243 = por %p241, %p242
      %p244 = scmp.le.s32.totalorder 1, %s28
      %p245 = scmp.lt.s32.totalorder %s28, 3
      %p246 = pnand %p244, %p245
      %p247 = pneg %p246
      // Predicated region
      $region9: #{tpu_custom_call.1} parent=5 // pred_check
        _
      $region10: #{tpu_custom_call.1} parent=5 // pred_check_branch
        %249 = sbr.rel (%p246) target = $region12
      $region11: #{tpu_custom_call.1} parent=5 // pred_region
        %s250 = ssub.s32 %s28, 1
        // Predicated region
        $region13: #{tpu_custom_call.1} parent=11 // pred_check
          %p251 = pneg %p117
        $region14: #{tpu_custom_call.1} parent=11 // pred_check_branch
          %253 = sbr.rel (%p251) target = $region16
        $region15: #{tpu_custom_call.1} parent=11 // pred_region
          %s255 = ssub.s32 1024, 1024
          %256 = vsyncadd [#allocation6], %s255
          %s257 = sshll.u32 [#allocation7], 4
          %s258 = int_to_ptr.vmem [resolvable:$true] %s257
          %263 = dma.hbm_to_vmem [thread:$0]  %s2, 1024, %s258, [#allocation6], 64, 64, 4
        $region16: #{tpu_custom_call.1} parent=11 // pred_fallthru
          _
        // Predicated region
        $region17: #{tpu_custom_call.1} parent=11 // pred_check
          %p264 = pneg %p138
        $region18: #{tpu_custom_call.1} parent=11 // pred_check_branch
          %266 = sbr.rel (%p264) target = $region20
        $region19: #{tpu_custom_call.1} parent=11 // pred_region
          %s268 = ssub.s32 1024, 1024
          %269 = vsyncadd [#allocation9], %s268
          %s270 = sshll.u32 [#allocation8], 4
          %s271 = int_to_ptr.vmem [resolvable:$true] %s270
          %276 = dma.hbm_to_vmem [thread:$0]  %s3, 1024, %s271, [#allocation9], 64, 64, 4
        $region20: #{tpu_custom_call.1} parent=11 // pred_fallthru
          _
        // Predicated region
        $region21: #{tpu_custom_call.1} parent=11 // pred_check
          %p277 = pneg %p159
        $region22: #{tpu_custom_call.1} parent=11 // pred_check_branch
          %279 = sbr.rel (%p277) target = $region24
        $region23: #{tpu_custom_call.1} parent=11 // pred_region
          %s281 = ssub.s32 16, 16
          %282 = vsyncadd [#allocation9], %s281
          %s284 = sshll.u32 [#allocation10], 4
          %s285 = int_to_ptr.vmem [resolvable:$true] %s284
          %287 = dma.hbm_to_vmem [thread:$0]  %s4, 16, %s285, [#allocation9]
        $region24: #{tpu_custom_call.1} parent=11 // pred_fallthru
          _
        // Predicated region
        $region25: #{tpu_custom_call.1} parent=11 // pred_check
          %p288 = pneg %p180
        $region26: #{tpu_custom_call.1} parent=11 // pred_check_branch
          %290 = sbr.rel (%p288) target = $region28
        $region27: #{tpu_custom_call.1} parent=11 // pred_region
          %s292 = ssub.s32 16, 16
          %293 = vsyncadd [#allocation12], %s292
          %s295 = sshll.u32 [#allocation11], 4
          %s296 = int_to_ptr.vmem [resolvable:$true] %s295
          %298 = dma.hbm_to_vmem [thread:$0]  %s5, 16, %s296, [#allocation12]
        $region28: #{tpu_custom_call.1} parent=11 // pred_fallthru
          _
      $region12: #{tpu_custom_call.1} parent=5 // pred_fallthru
        _
      %p299 = scmp.lt.s32.totalorder %s28, 2
      // Predicated region
      $region29: #{tpu_custom_call.1} parent=5 // pred_check
        %p300 = pneg %p299
      $region30: #{tpu_custom_call.1} parent=5 // pred_check_branch
        %302 = sbr.rel (%p300) target = $region32
      $region31: #{tpu_custom_call.1} parent=5 // pred_region
        // Predicated region
        $region33: #{tpu_custom_call.1} parent=31 // pred_check
          %p303 = pneg %p62
        $region34: #{tpu_custom_call.1} parent=31 // pred_check_branch
          %305 = sbr.rel (%p303) target = $region36
        $region35: #{tpu_custom_call.1} parent=31 // pred_region
          %s306 = sand.u32 %s52, 1
          %s307 = scalar_lea.sflag [#allocation3], %s306
          %s308 = sand.u32 %s52, 1
          %s309 = smul.addr %s308, 8
          %s310 = scalar_lea.vmem [#allocation2], %s309
          %s312 = ssub.s32 128, 128
          %313 = vsyncadd %s307, %s312
          %s314 = sadd.s32 %s36, %s35
          %s315 = smul.addr %s314, 128
          %s316 = scalar_lea.hbm %s0, %s315
          %s318 = sshll.u32 %s310, 4
          %s319 = int_to_ptr.vmem [resolvable:$true] %s318
          %321 = dma.hbm_to_vmem [thread:$0]  %s316, 128, %s319, %s307
        $region36: #{tpu_custom_call.1} parent=31 // pred_fallthru
          _
        // Predicated region
        $region37: #{tpu_custom_call.1} parent=31 // pred_check
          %p322 = pneg %p90
        $region38: #{tpu_custom_call.1} parent=31 // pred_check_branch
          %324 = sbr.rel (%p322) target = $region40
        $region39: #{tpu_custom_call.1} parent=31 // pred_region
          %s325 = sand.u32 %s28, 1
          %s326 = scalar_lea.sflag [#allocation6], %s325
          %s327 = sand.u32 %s80, 1
          %s328 = smul.addr %s327, 8
          %s329 = scalar_lea.vmem [#allocation5], %s328
          %s331 = ssub.s32 128, 128
          %332 = vsyncadd %s326, %s331
          %s333 = sadd.s32 %s36, %s35
          %s334 = smul.addr %s333, 128
          %s335 = scalar_lea.hbm %s1, %s334
          %s337 = sshll.u32 %s329, 4
          %s338 = int_to_ptr.vmem [resolvable:$true] %s337
          %340 = dma.hbm_to_vmem [thread:$0]  %s335, 128, %s338, %s326
        $region40: #{tpu_custom_call.1} parent=31 // pred_fallthru
          _
      $region32: #{tpu_custom_call.1} parent=5 // pred_fallthru
        _
      %p341 = scmp.le.s32.totalorder 1, %s28
      %p342 = scmp.lt.s32.totalorder %s28, 3
      %p343 = pnand %p341, %p342
      %p344 = pneg %p343
      // Predicated region
      $region41: #{tpu_custom_call.1} parent=5 // pred_check
        _
      $region42: #{tpu_custom_call.1} parent=5 // pred_check_branch
        %346 = sbr.rel (%p343) target = $region44
      $region43: #{tpu_custom_call.1} parent=5 // pred_region
        %s347 = ssub.s32 %s28, 1
        %s348 = sand.u32 %s55, 1
        %s349 = scalar_lea.sflag [#allocation3], %s348
        %s350 = sand.u32 %s55, 1
        %s351 = smul.addr %s350, 8
        %s352 = scalar_lea.vmem [#allocation2], %s351
        // Predicated region
        $region45: #{tpu_custom_call.1} parent=43 // pred_check
          %p353 = pneg %p68
        $region46: #{tpu_custom_call.1} parent=43 // pred_check_branch
          %355 = sbr.rel (%p353) target = $region48
        $region47: #{tpu_custom_call.1} parent=43 // pred_region
          %356 = dma.done %s349, 128
        $region48: #{tpu_custom_call.1} parent=43 // pred_fallthru
          _
        %s357 = sand.u32 %s33, 1
        %s358 = scalar_lea.sflag [#allocation6], %s357
        %s359 = sand.u32 %s83, 1
        %s360 = smul.addr %s359, 8
        %s361 = scalar_lea.vmem [#allocation5], %s360
        // Predicated region
        $region49: #{tpu_custom_call.1} parent=43 // pred_check
          %p362 = pneg %p96
        $region50: #{tpu_custom_call.1} parent=43 // pred_check_branch
          %364 = sbr.rel (%p362) target = $region52
        $region51: #{tpu_custom_call.1} parent=43 // pred_region
          %365 = dma.done %s358, 128
        $region52: #{tpu_custom_call.1} parent=43 // pred_fallthru
          _
        // Predicated region
        $region53: #{tpu_custom_call.1} parent=43 // pred_check
          %p366 = pneg %p117
        $region54: #{tpu_custom_call.1} parent=43 // pred_check_branch
          %368 = sbr.rel (%p366) target = $region56
        $region55: #{tpu_custom_call.1} parent=43 // pred_region
          %369 = dma.done [#allocation6], 1024
        $region56: #{tpu_custom_call.1} parent=43 // pred_fallthru
          _
        // Predicated region
        $region57: #{tpu_custom_call.1} parent=43 // pred_check
          %p370 = pneg %p138
        $region58: #{tpu_custom_call.1} parent=43 // pred_check_branch
          %372 = sbr.rel (%p370) target = $region60
        $region59: #{tpu_custom_call.1} parent=43 // pred_region
          %373 = dma.done [#allocation9], 1024
        $region60: #{tpu_custom_call.1} parent=43 // pred_fallthru
          _
        // Predicated region
        $region61: #{tpu_custom_call.1} parent=43 // pred_check
          %p374 = pneg %p159
        $region62: #{tpu_custom_call.1} parent=43 // pred_check_branch
          %376 = sbr.rel (%p374) target = $region64
        $region63: #{tpu_custom_call.1} parent=43 // pred_region
          %377 = dma.done [#allocation9], 16
        $region64: #{tpu_custom_call.1} parent=43 // pred_fallthru
          _
        // Predicated region
        $region65: #{tpu_custom_call.1} parent=43 // pred_check
          %p378 = pneg %p180
        $region66: #{tpu_custom_call.1} parent=43 // pred_check_branch
          %380 = sbr.rel (%p378) target = $region68
        $region67: #{tpu_custom_call.1} parent=43 // pred_region
          %381 = dma.done [#allocation12], 16
        $region68: #{tpu_custom_call.1} parent=43 // pred_fallthru
          _
        %s382 = sand.u32 %s55, 1
        %s383 = scalar_lea.sflag [#allocation3], %s382
        %s384 = sand.u32 %s55, 1
        %s385 = smul.addr %s384, 8
        %s386 = scalar_lea.vmem [#allocation2], %s385
        %p387 = pneg %p68
        %p388 = pneg %p65
        %s389 = sand.u32 %s33, 1
        %s390 = scalar_lea.sflag [#allocation6], %s389
        %s391 = sand.u32 %s83, 1
        %s392 = smul.addr %s391, 8
        %s393 = scalar_lea.vmem [#allocation5], %s392
        %p394 = pneg %p96
        %p395 = pneg %p93
        %p396 = pneg %p117
        %p397 = pneg %p114
        %p398 = pneg %p138
        %p399 = pneg %p135
        %p400 = pneg %p159
        %p401 = pneg %p156
        %p402 = pneg %p180
        %p403 = pneg %p177
        %p404 = pneg %p208
        %p405 = pneg %p205
        %s406 = sand.u32 %s195, 1
        %s407 = scalar_lea.sflag [#allocation4], %s406
        %s408 = sand.u32 %s195, 1
        %s409 = smul.addr %s408, 16
        %s410 = scalar_lea.vmem [#allocation13], %s409
        %p411 = pneg %p236
        %p412 = pneg %p233
        %s413 = sand.u32 %s223, 1
        %s414 = scalar_lea.sflag [#allocation15], %s413
        %s415 = sand.u32 %s223, 1
        %s416 = smul.addr %s415, 16
        %s417 = scalar_lea.vmem [#allocation14], %s416
        %v419 = vld [vmem:[%s352] sm:$0xff]
        %v420 = vpack.c.bf16 %v419, %v419
        %v421 = vld [vmem:[%s361] sm:$0xff]
        %v422 = vpack.c.bf16 %v421, %v421
        %v423 = vld [vmem:[#allocation7] sm:$0xf]
        %v424 = vld [vmem:[#allocation7 + $0x4] sm:$0xf]
        %v425 = vld [vmem:[#allocation7 + $0x8] sm:$0xf]
        %v426 = vld [vmem:[#allocation7 + $0xc] sm:$0xf]
        %v427 = vld [vmem:[#allocation7 + $0x10] sm:$0xf]
        %v428 = vld [vmem:[#allocation7 + $0x14] sm:$0xf]
        %v429 = vld [vmem:[#allocation7 + $0x18] sm:$0xf]
        %v430 = vld [vmem:[#allocation7 + $0x1c] sm:$0xf]
        %v431 = vld [vmem:[#allocation7 + $0x20] sm:$0xf]
        %v432 = vld [vmem:[#allocation7 + $0x24] sm:$0xf]
        %v433 = vld [vmem:[#allocation7 + $0x28] sm:$0xf]
        %v434 = vld [vmem:[#allocation7 + $0x2c] sm:$0xf]
        %v435 = vld [vmem:[#allocation7 + $0x30] sm:$0xf]
        %v436 = vld [vmem:[#allocation7 + $0x34] sm:$0xf]
        %v437 = vld [vmem:[#allocation7 + $0x38] sm:$0xf]
        %v438 = vld [vmem:[#allocation7 + $0x3c] sm:$0xf]
        %v439 = vld [vmem:[#allocation10] sm:$0x1]
        %v441 = vlaneseq
        %v442 = vshrl.u32 %v441, 7
        %v443 = vsub.s32 0, %v442
        %v444 = vrot.slane %v439, %v443
        %v462 = vunpack.c.l.b16 %v423
        %v463 = vunpack.c.l.b16 %v424
        %v464 = vunpack.c.l.b16 %v425
        %v465 = vunpack.c.l.b16 %v426
        %v466 = vunpack.c.l.b16 %v427
        %v467 = vunpack.c.l.b16 %v428
        %v468 = vunpack.c.l.b16 %v429
        %v469 = vunpack.c.l.b16 %v430
        %v470 = vunpack.c.l.b16 %v431
        %v471 = vunpack.c.l.b16 %v432
        %v472 = vunpack.c.l.b16 %v433
        %v473 = vunpack.c.l.b16 %v434
        %v474 = vunpack.c.l.b16 %v435
        %v475 = vunpack.c.l.b16 %v436
        %v476 = vunpack.c.l.b16 %v437
        %v477 = vunpack.c.l.b16 %v438
        %v478 = vpack.c.b16 %v463, %v462
        %v479 = vpack.c.b16 %v465, %v464
        %v480 = vpack.c.b16 %v467, %v466
        %v481 = vpack.c.b16 %v469, %v468
        %v482 = vpack.c.b16 %v471, %v470
        %v483 = vpack.c.b16 %v473, %v472
        %v484 = vpack.c.b16 %v475, %v474
        %v485 = vpack.c.b16 %v477, %v476
        %494 = vmatprep.subr.bf16.mxu0 0
        %495 = vmatpush1.bf16.msra.mxu0 %v478
        %496 = vmatprep.subr.bf16.mxu0 0
        %497 = vmatpush1.bf16.msra.mxu0 %v479
        %498 = vmatprep.subr.bf16.mxu0 0
        %499 = vmatpush1.bf16.msra.mxu0 %v480
        %500 = vmatprep.subr.bf16.mxu0 0
        %501 = vmatpush1.bf16.msra.mxu0 %v481
        %502 = vmatprep.subr.bf16.mxu0 0
        %503 = vmatpush1.bf16.msra.mxu0 %v482
        %504 = vmatprep.subr.bf16.mxu0 0
        %505 = vmatpush1.bf16.msra.mxu0 %v483
        %506 = vmatprep.subr.bf16.mxu0 0
        %507 = vmatpush1.bf16.msra.mxu0 %v484
        %508 = vmatprep.subr.bf16.mxu0 0
        %509 = vmatpush1.bf16.msra.mxu0 %v485
        %510 = vmatprep.subr.bf16.mxu0 0
        %511 = vmatpush1.bf16.msra.mxu0 0
        %512 = vmatprep.subr.bf16.mxu0 0
        %513 = vmatpush1.bf16.msra.mxu0 0
        %514 = vmatprep.subr.bf16.mxu0 0
        %515 = vmatpush1.bf16.msra.mxu0 0
        %516 = vmatprep.subr.bf16.mxu0 0
        %517 = vmatpush1.bf16.msra.mxu0 0
        %518 = vmatprep.subr.bf16.mxu0 0
        %519 = vmatpush1.bf16.msra.mxu0 0
        %520 = vmatprep.subr.bf16.mxu0 0
        %521 = vmatpush1.bf16.msra.mxu0 0
        %522 = vmatprep.subr.bf16.mxu0 0
        %523 = vmatpush1.bf16.msra.mxu0 0
        %524 = vmatprep.subr.bf16.mxu0 0
        %525 = vmatpush1.bf16.msra.mxu0 0
        %526 = vmatprep.mubr.bf16.mxu0 0
        %527 = vmatmul.mubr.bf16.gmra.mrb[0].mxu0 %v420
        %v528 = vpop.f32.mrb[0].mxu0
        %v529 = vadd.f32 %v444, %v528
        %v530 = vpop.f32.mrb[0].mxu0
        %v531 = vpop.f32.mrb[0].mxu0
        %v532 = vpop.f32.mrb[0].mxu0
        %533 = vdwg.mxu0
        %v534 = vld [vmem:[#allocation8] sm:$0xf]
        %v535 = vld [vmem:[#allocation8 + $0x4] sm:$0xf]
        %v536 = vld [vmem:[#allocation8 + $0x8] sm:$0xf]
        %v537 = vld [vmem:[#allocation8 + $0xc] sm:$0xf]
        %v538 = vld [vmem:[#allocation8 + $0x10] sm:$0xf]
        %v539 = vld [vmem:[#allocation8 + $0x14] sm:$0xf]
        %v540 = vld [vmem:[#allocation8 + $0x18] sm:$0xf]
        %v541 = vld [vmem:[#allocation8 + $0x1c] sm:$0xf]
        %v542 = vld [vmem:[#allocation8 + $0x20] sm:$0xf]
        %v543 = vld [vmem:[#allocation8 + $0x24] sm:$0xf]
        %v544 = vld [vmem:[#allocation8 + $0x28] sm:$0xf]
        %v545 = vld [vmem:[#allocation8 + $0x2c] sm:$0xf]
        %v546 = vld [vmem:[#allocation8 + $0x30] sm:$0xf]
        %v547 = vld [vmem:[#allocation8 + $0x34] sm:$0xf]
        %v548 = vld [vmem:[#allocation8 + $0x38] sm:$0xf]
        %v549 = vld [vmem:[#allocation8 + $0x3c] sm:$0xf]
        %v550 = vld [vmem:[#allocation11] sm:$0x1]
        %v552 = vlaneseq
        %v553 = vshrl.u32 %v552, 7
        %v554 = vsub.s32 0, %v553
        %v555 = vrot.slane %v550, %v554
        %v573 = vunpack.c.l.b16 %v534
        %v574 = vunpack.c.l.b16 %v535
        %v575 = vunpack.c.l.b16 %v536
        %v576 = vunpack.c.l.b16 %v537
        %v577 = vunpack.c.l.b16 %v538
        %v578 = vunpack.c.l.b16 %v539
        %v579 = vunpack.c.l.b16 %v540
        %v580 = vunpack.c.l.b16 %v541
        %v581 = vunpack.c.l.b16 %v542
        %v582 = vunpack.c.l.b16 %v543
        %v583 = vunpack.c.l.b16 %v544
        %v584 = vunpack.c.l.b16 %v545
        %v585 = vunpack.c.l.b16 %v546
        %v586 = vunpack.c.l.b16 %v547
        %v587 = vunpack.c.l.b16 %v548
        %v588 = vunpack.c.l.b16 %v549
        %v589 = vpack.c.b16 %v574, %v573
        %v590 = vpack.c.b16 %v576, %v575
        %v591 = vpack.c.b16 %v578, %v577
        %v592 = vpack.c.b16 %v580, %v579
        %v593 = vpack.c.b16 %v582, %v581
        %v594 = vpack.c.b16 %v584, %v583
        %v595 = vpack.c.b16 %v586, %v585
        %v596 = vpack.c.b16 %v588, %v587
        %605 = vmatprep.subr.bf16.mxu0 0
        %606 = vmatpush1.bf16.msra.mxu0 %v589
        %607 = vmatprep.subr.bf16.mxu0 0
        %608 = vmatpush1.bf16.msra.mxu0 %v590
        %609 = vmatprep.subr.bf16.mxu0 0
        %610 = vmatpush1.bf16.msra.mxu0 %v591
        %611 = vmatprep.subr.bf16.mxu0 0
        %612 = vmatpush1.bf16.msra.mxu0 %v592
        %613 = vmatprep.subr.bf16.mxu0 0
        %614 = vmatpush1.bf16.msra.mxu0 %v593
        %615 = vmatprep.subr.bf16.mxu0 0
        %616 = vmatpush1.bf16.msra.mxu0 %v594
        %617 = vmatprep.subr.bf16.mxu0 0
        %618 = vmatpush1.bf16.msra.mxu0 %v595
        %619 = vmatprep.subr.bf16.mxu0 0
        %620 = vmatpush1.bf16.msra.mxu0 %v596
        %621 = vmatprep.subr.bf16.mxu0 0
        %622 = vmatpush1.bf16.msra.mxu0 0
        %623 = vmatprep.subr.bf16.mxu0 0
        %624 = vmatpush1.bf16.msra.mxu0 0
        %625 = vmatprep.subr.bf16.mxu0 0
        %626 = vmatpush1.bf16.msra.mxu0 0
        %627 = vmatprep.subr.bf16.mxu0 0
        %628 = vmatpush1.bf16.msra.mxu0 0
        %629 = vmatprep.subr.bf16.mxu0 0
        %630 = vmatpush1.bf16.msra.mxu0 0
        %631 = vmatprep.subr.bf16.mxu0 0
        %632 = vmatpush1.bf16.msra.mxu0 0
        %633 = vmatprep.subr.bf16.mxu0 0
        %634 = vmatpush1.bf16.msra.mxu0 0
        %635 = vmatprep.subr.bf16.mxu0 0
        %636 = vmatpush1.bf16.msra.mxu0 0
        %637 = vmatprep.mubr.bf16.mxu0 0
        %638 = vmatmul.mubr.bf16.gmra.mrb[0].mxu0 %v422
        %v639 = vpop.f32.mrb[0].mxu0
        %v640 = vadd.f32 %v555, %v639
        %v641 = vpop.f32.mrb[0].mxu0
        %v642 = vpop.f32.mrb[0].mxu0
        %v643 = vpop.f32.mrb[0].mxu0
        %644 = vdwg.mxu0
        %646 = vrot.lane.b32.xlu0 %v529, 96
        %v647 = vpop.permute.xlu0 %646
        %649 = vrot.lane.b32.xlu0 %v529, 64
        %v650 = vpop.permute.xlu0 %649
        %652 = vrot.lane.b32.xlu0 %v529, 32
        %v653 = vpop.permute.xlu0 %652
        %v655 = vcombine.low %v529, %v650
        %v656 = vcombine.high %v529, %v650
        %v658 = vunpack.c.l.s4 1983009808
        %v659 = vunpack.c.0.s8 %v658
        %v660 = vlaneseq
        %v661 = vshrl.u32 %v660, 7
        %v662 = vsub.s32 %v659, %v661
        %v663 = vrot.slane %v655, %v662
        %v665 = vunpack.c.l.s4 1983009808
        %v666 = vunpack.c.0.s8 %v665
        %v667 = vlaneseq
        %v668 = vshrl.u32 %v667, 7
        %v669 = vsub.s32 %v666, %v668
        %v670 = vrot.slane %v656, %v669
        %v671 = vcombine.low %v647, %v653
        %v672 = vcombine.high %v647, %v653
        %v674 = vunpack.c.l.s4 1983009808
        %v675 = vunpack.c.0.s8 %v674
        %v676 = vlaneseq
        %v677 = vshrl.u32 %v676, 7
        %v678 = vsub.s32 %v675, %v677
        %v679 = vrot.slane %v671, %v678
        %v681 = vunpack.c.l.s4 1983009808
        %v682 = vunpack.c.0.s8 %v681
        %v683 = vlaneseq
        %v684 = vshrl.u32 %v683, 7
        %v685 = vsub.s32 %v682, %v684
        %v686 = vrot.slane %v672, %v685
        %v687 = vcombine.low %v663, %v679
        %v688 = vcombine.high %v663, %v679
        %v690 = vunpack.c.l.s4 1934713408
        %v691 = vunpack.c.0.s8 %v690
        %v692 = vlaneseq
        %v693 = vshrl.u32 %v692, 7
        %v694 = vsub.s32 %v691, %v693
        %v695 = vrot.slane %v687, %v694
        %v697 = vunpack.c.l.s4 1934713408
        %v698 = vunpack.c.0.s8 %v697
        %v699 = vlaneseq
        %v700 = vshrl.u32 %v699, 7
        %v701 = vsub.s32 %v698, %v700
        %v702 = vrot.slane %v688, %v701
        %v703 = vcombine.low %v670, %v686
        %v704 = vcombine.high %v670, %v686
        %v706 = vunpack.c.l.s4 1934713408
        %v707 = vunpack.c.0.s8 %v706
        %v708 = vlaneseq
        %v709 = vshrl.u32 %v708, 7
        %v710 = vsub.s32 %v707, %v709
        %v711 = vrot.slane %v703, %v710
        %v713 = vunpack.c.l.s4 1934713408
        %v714 = vunpack.c.0.s8 %v713
        %v715 = vlaneseq
        %v716 = vshrl.u32 %v715, 7
        %v717 = vsub.s32 %v714, %v716
        %v718 = vrot.slane %v704, %v717
        %v719 = vcombine.high %v695, 0.0
        %v720 = vcombine.high %v702, 0.0
        %v721 = vcombine.high %v711, 0.0
        %v722 = vcombine.high %v718, 0.0
        %v723 = vcombine.low %v695, %v702
        %v725 = vunpack.c.l.s4 1983009808
        %v726 = vunpack.c.0.s8 %v725
        %v727 = vlaneseq
        %v728 = vshrl.u32 %v727, 7
        %v729 = vsub.s32 %v726, %v728
        %v730 = vrot.slane %v723, %v729
        %v731 = vcombine.low %v719, %v720
        %v733 = vunpack.c.l.s4 1983009808
        %v734 = vunpack.c.0.s8 %v733
        %v735 = vlaneseq
        %v736 = vshrl.u32 %v735, 7
        %v737 = vsub.s32 %v734, %v736
        %v738 = vrot.slane %v731, %v737
        %v739 = vcombine.low %v711, %v718
        %v741 = vunpack.c.l.s4 1983009808
        %v742 = vunpack.c.0.s8 %v741
        %v743 = vlaneseq
        %v744 = vshrl.u32 %v743, 7
        %v745 = vsub.s32 %v742, %v744
        %v746 = vrot.slane %v739, %v745
        %v747 = vcombine.low %v721, %v722
        %v749 = vunpack.c.l.s4 1983009808
        %v750 = vunpack.c.0.s8 %v749
        %v751 = vlaneseq
        %v752 = vshrl.u32 %v751, 7
        %v753 = vsub.s32 %v750, %v752
        %v754 = vrot.slane %v747, %v753
        %v755 = vcombine.low %v730, %v738
        %v756 = vcombine.high %v730, %v738
        %v758 = vunpack.c.l.s4 1934713408
        %v759 = vunpack.c.0.s8 %v758
        %v760 = vlaneseq
        %v761 = vshrl.u32 %v760, 7
        %v762 = vsub.s32 %v759, %v761
        %v763 = vrot.slane %v755, %v762
        %v765 = vunpack.c.l.s4 1934713408
        %v766 = vunpack.c.0.s8 %v765
        %v767 = vlaneseq
        %v768 = vshrl.u32 %v767, 7
        %v769 = vsub.s32 %v766, %v768
        %v770 = vrot.slane %v756, %v769
        %v771 = vcombine.low %v746, %v754
        %v772 = vcombine.high %v746, %v754
        %v774 = vunpack.c.l.s4 1934713408
        %v775 = vunpack.c.0.s8 %v774
        %v776 = vlaneseq
        %v777 = vshrl.u32 %v776, 7
        %v778 = vsub.s32 %v775, %v777
        %v779 = vrot.slane %v771, %v778
        %v781 = vunpack.c.l.s4 1934713408
        %v782 = vunpack.c.0.s8 %v781
        %v783 = vlaneseq
        %v784 = vshrl.u32 %v783, 7
        %v785 = vsub.s32 %v782, %v784
        %v786 = vrot.slane %v772, %v785
        %v787 = vcombine.low %v763, %v779
        %v788 = vcombine.high %v763, %v779
        %v789 = vcombine.low %v770, %v786
        %v790 = vcombine.high %v770, %v786
        %v791 = vpack.c.bf16 %v787, %v787
        %v792 = vpack.c.bf16 %v788, %v788
        %v793 = vpack.c.bf16 %v789, %v789
        %v794 = vpack.c.bf16 %v790, %v790
        %vm795 = vcmask 257024
        %796 = vst.msk [vmem:[%s410] sm:$0xf] %vm795, %v791
        %797 = vst.msk [vmem:[%s410 + $0x4] sm:$0xf] %vm795, %v792
        %798 = vst.msk [vmem:[%s410 + $0x8] sm:$0xf] %vm795, %v793
        %799 = vst.msk [vmem:[%s410 + $0xc] sm:$0xf] %vm795, %v794
        %801 = vrot.lane.b32.xlu0 %v640, 96
        %v802 = vpop.permute.xlu0 %801
        %804 = vrot.lane.b32.xlu0 %v640, 64
        %v805 = vpop.permute.xlu0 %804
        %807 = vrot.lane.b32.xlu0 %v640, 32
        %v808 = vpop.permute.xlu0 %807
        %v810 = vcombine.low %v640, %v805
        %v811 = vcombine.high %v640, %v805
        %v813 = vunpack.c.l.s4 1983009808
        %v814 = vunpack.c.0.s8 %v813
        %v815 = vlaneseq
        %v816 = vshrl.u32 %v815, 7
        %v817 = vsub.s32 %v814, %v816
        %v818 = vrot.slane %v810, %v817
        %v820 = vunpack.c.l.s4 1983009808
        %v821 = vunpack.c.0.s8 %v820
        %v822 = vlaneseq
        %v823 = vshrl.u32 %v822, 7
        %v824 = vsub.s32 %v821, %v823
        %v825 = vrot.slane %v811, %v824
        %v826 = vcombine.low %v802, %v808
        %v827 = vcombine.high %v802, %v808
        %v829 = vunpack.c.l.s4 1983009808
        %v830 = vunpack.c.0.s8 %v829
        %v831 = vlaneseq
        %v832 = vshrl.u32 %v831, 7
        %v833 = vsub.s32 %v830, %v832
        %v834 = vrot.slane %v826, %v833
        %v836 = vunpack.c.l.s4 1983009808
        %v837 = vunpack.c.0.s8 %v836
        %v838 = vlaneseq
        %v839 = vshrl.u32 %v838, 7
        %v840 = vsub.s32 %v837, %v839
        %v841 = vrot.slane %v827, %v840
        %v842 = vcombine.low %v818, %v834
        %v843 = vcombine.high %v818, %v834
        %v845 = vunpack.c.l.s4 1934713408
        %v846 = vunpack.c.0.s8 %v845
        %v847 = vlaneseq
        %v848 = vshrl.u32 %v847, 7
        %v849 = vsub.s32 %v846, %v848
        %v850 = vrot.slane %v842, %v849
        %v852 = vunpack.c.l.s4 1934713408
        %v853 = vunpack.c.0.s8 %v852
        %v854 = vlaneseq
        %v855 = vshrl.u32 %v854, 7
        %v856 = vsub.s32 %v853, %v855
        %v857 = vrot.slane %v843, %v856
        %v858 = vcombine.low %v825, %v841
        %v859 = vcombine.high %v825, %v841
        %v861 = vunpack.c.l.s4 1934713408
        %v862 = vunpack.c.0.s8 %v861
        %v863 = vlaneseq
        %v864 = vshrl.u32 %v863, 7
        %v865 = vsub.s32 %v862, %v864
        %v866 = vrot.slane %v858, %v865
        %v868 = vunpack.c.l.s4 1934713408
        %v869 = vunpack.c.0.s8 %v868
        %v870 = vlaneseq
        %v871 = vshrl.u32 %v870, 7
        %v872 = vsub.s32 %v869, %v871
        %v873 = vrot.slane %v859, %v872
        %v874 = vcombine.high %v850, 0.0
        %v875 = vcombine.high %v857, 0.0
        %v876 = vcombine.high %v866, 0.0
        %v877 = vcombine.high %v873, 0.0
        %v878 = vcombine.low %v850, %v857
        %v880 = vunpack.c.l.s4 1983009808
        %v881 = vunpack.c.0.s8 %v880
        %v882 = vlaneseq
        %v883 = vshrl.u32 %v882, 7
        %v884 = vsub.s32 %v881, %v883
        %v885 = vrot.slane %v878, %v884
        %v886 = vcombine.low %v874, %v875
        %v888 = vunpack.c.l.s4 1983009808
        %v889 = vunpack.c.0.s8 %v888
        %v890 = vlaneseq
        %v891 = vshrl.u32 %v890, 7
        %v892 = vsub.s32 %v889, %v891
        %v893 = vrot.slane %v886, %v892
        %v894 = vcombine.low %v866, %v873
        %v896 = vunpack.c.l.s4 1983009808
        %v897 = vunpack.c.0.s8 %v896
        %v898 = vlaneseq
        %v899 = vshrl.u32 %v898, 7
        %v900 = vsub.s32 %v897, %v899
        %v901 = vrot.slane %v894, %v900
        %v902 = vcombine.low %v876, %v877
        %v904 = vunpack.c.l.s4 1983009808
        %v905 = vunpack.c.0.s8 %v904
        %v906 = vlaneseq
        %v907 = vshrl.u32 %v906, 7
        %v908 = vsub.s32 %v905, %v907
        %v909 = vrot.slane %v902, %v908
        %v910 = vcombine.low %v885, %v893
        %v911 = vcombine.high %v885, %v893
        %v913 = vunpack.c.l.s4 1934713408
        %v914 = vunpack.c.0.s8 %v913
        %v915 = vlaneseq
        %v916 = vshrl.u32 %v915, 7
        %v917 = vsub.s32 %v914, %v916
        %v918 = vrot.slane %v910, %v917
        %v920 = vunpack.c.l.s4 1934713408
        %v921 = vunpack.c.0.s8 %v920
        %v922 = vlaneseq
        %v923 = vshrl.u32 %v922, 7
        %v924 = vsub.s32 %v921, %v923
        %v925 = vrot.slane %v911, %v924
        %v926 = vcombine.low %v901, %v909
        %v927 = vcombine.high %v901, %v909
        %v929 = vunpack.c.l.s4 1934713408
        %v930 = vunpack.c.0.s8 %v929
        %v931 = vlaneseq
        %v932 = vshrl.u32 %v931, 7
        %v933 = vsub.s32 %v930, %v932
        %v934 = vrot.slane %v926, %v933
        %v936 = vunpack.c.l.s4 1934713408
        %v937 = vunpack.c.0.s8 %v936
        %v938 = vlaneseq
        %v939 = vshrl.u32 %v938, 7
        %v940 = vsub.s32 %v937, %v939
        %v941 = vrot.slane %v927, %v940
        %v942 = vcombine.low %v918, %v934
        %v943 = vcombine.high %v918, %v934
        %v944 = vcombine.low %v925, %v941
        %v945 = vcombine.high %v925, %v941
        %v946 = vpack.c.bf16 %v942, %v942
        %v947 = vpack.c.bf16 %v943, %v943
        %v948 = vpack.c.bf16 %v944, %v944
        %v949 = vpack.c.bf16 %v945, %v945
        %950 = vst.msk [vmem:[%s417] sm:$0xf] %vm795, %v946
        %951 = vst.msk [vmem:[%s417 + $0x4] sm:$0xf] %vm795, %v947
        %952 = vst.msk [vmem:[%s417 + $0x8] sm:$0xf] %vm795, %v948
        %953 = vst.msk [vmem:[%s417 + $0xc] sm:$0xf] %vm795, %v949
        %s954 = sand.u32 %s195, 1
        %s955 = scalar_lea.sflag [#allocation4], %s954
        %s956 = sand.u32 %s195, 1
        %s957 = smul.addr %s956, 16
        %s958 = scalar_lea.vmem [#allocation13], %s957
        %s959 = sand.u32 %s223, 1
        %s960 = scalar_lea.sflag [#allocation15], %s959
        %s961 = sand.u32 %s223, 1
        %s962 = smul.addr %s961, 16
        %s963 = scalar_lea.vmem [#allocation14], %s962
        // Predicated region
        $region69: #{tpu_custom_call.1} parent=43 // pred_check
          %p964 = pneg %p205
        $region70: #{tpu_custom_call.1} parent=43 // pred_check_branch
          %966 = sbr.rel (%p964) target = $region72
        $region71: #{tpu_custom_call.1} parent=43 // pred_region
          %s968 = ssub.s32 256, 256
          %969 = vsyncadd %s955, %s968
          %s970 = smul.addr %s37, 4
          %s971 = sadd.s32 %s38, %s970
          %s972 = smul.addr %s971, 64
          %s973 = scalar_lea.hbm %s6, %s972
          %s974 = sshll.u32 %s958, 4
          %s975 = int_to_ptr.vmem [resolvable:$true] %s974
          %980 = dma.vmem_to_hbm [thread:$0]  %s975, 256, %s973, %s955, 64, 64, 4
        $region72: #{tpu_custom_call.1} parent=43 // pred_fallthru
          _
        // Predicated region
        $region73: #{tpu_custom_call.1} parent=43 // pred_check
          %p981 = pneg %p233
        $region74: #{tpu_custom_call.1} parent=43 // pred_check_branch
          %983 = sbr.rel (%p981) target = $region76
        $region75: #{tpu_custom_call.1} parent=43 // pred_region
          %s985 = ssub.s32 256, 256
          %986 = vsyncadd %s960, %s985
          %s987 = smul.addr %s37, 4
          %s988 = sadd.s32 %s38, %s987
          %s989 = smul.addr %s988, 64
          %s990 = scalar_lea.hbm %s7, %s989
          %s991 = sshll.u32 %s963, 4
          %s992 = int_to_ptr.vmem [resolvable:$true] %s991
          %997 = dma.vmem_to_hbm [thread:$0]  %s992, 256, %s990, %s960, 64, 64, 4
        $region76: #{tpu_custom_call.1} parent=43 // pred_fallthru
          _
      $region44: #{tpu_custom_call.1} parent=5 // pred_fallthru
        _
      %p998 = scmp.le.s32.totalorder 2, %s28
      // Predicated region
      $region77: #{tpu_custom_call.1} parent=5 // pred_check
        %p999 = pneg %p998
      $region78: #{tpu_custom_call.1} parent=5 // pred_check_branch
        %1001 = sbr.rel (%p999) target = $region80
      $region79: #{tpu_custom_call.1} parent=5 // pred_region
        %s1002 = ssub.s32 %s28, 2
        // Predicated region
        $region81: #{tpu_custom_call.1} parent=79 // pred_check
          %p1003 = pneg %p211
        $region82: #{tpu_custom_call.1} parent=79 // pred_check_branch
          %1005 = sbr.rel (%p1003) target = $region84
        $region83: #{tpu_custom_call.1} parent=79 // pred_region
          %s1006 = sand.u32 %s196, 1
          %s1007 = scalar_lea.sflag [#allocation4], %s1006
          %s1008 = sand.u32 %s196, 1
          %s1009 = smul.addr %s1008, 16
          %s1010 = scalar_lea.vmem [#allocation13], %s1009
          %1011 = dma.done %s1007, 256
        $region84: #{tpu_custom_call.1} parent=79 // pred_fallthru
          _
        // Predicated region
        $region85: #{tpu_custom_call.1} parent=79 // pred_check
          %p1012 = pneg %p239
        $region86: #{tpu_custom_call.1} parent=79 // pred_check_branch
          %1014 = sbr.rel (%p1012) target = $region88
        $region87: #{tpu_custom_call.1} parent=79 // pred_region
          %s1015 = sand.u32 %s224, 1
          %s1016 = scalar_lea.sflag [#allocation15], %s1015
          %s1017 = sand.u32 %s224, 1
          %s1018 = smul.addr %s1017, 16
          %s1019 = scalar_lea.vmem [#allocation14], %s1018
          %1020 = dma.done %s1016, 256
        $region88: #{tpu_custom_call.1} parent=79 // pred_fallthru
          _
      $region80: #{tpu_custom_call.1} parent=5 // pred_fallthru
        _
    $region6: #{tpu_custom_call.1} parent=1 // loop_footer
      %s32 = sadd.s32 1, %s28
    $region7: #{tpu_custom_call.1} parent=1 // loop_footer_branch
      %27 = sbr.rel target = $region3
    $region8: #{tpu_custom_call.1} parent=1 // loop_exit
      _
    %1021 = vsyncpa [#allocation3], 1
    %s1022 = scalar_lea.sflag [#allocation3], 1
    %1023 = vsyncpa %s1022, 1
    %1024 = vsyncpa [#allocation6], 1
    %s1025 = scalar_lea.sflag [#allocation6], 1
    %1026 = vsyncpa %s1025, 1
    %1027 = vsyncpa [#allocation9], 1
    %1028 = vsyncpa [#allocation12], 1
    %1029 = vsyncpa [#allocation4], 1
    %s1030 = scalar_lea.sflag [#allocation4], 1
    %1031 = vsyncpa %s1030, 1
    %1032 = vsyncpa [#allocation15], 1
    %s1033 = scalar_lea.sflag [#allocation15], 1
    %1034 = vsyncpa %s1033, 1

</llo_original>
